<compile_context>
chip_gen: v7x
topology: tpu7x:2x2x1
jax: 0.10.0
libtpu: 0.0.40
codegen_flags: <defaults>
</compile_context>

<pallas_src>
import jax
import jax.numpy as jnp
from jax.experimental import pallas as pl
from jax.experimental.pallas import tpu as pltpu

BN_EPS = 1e-5
LANE = 128     # lane width  -> pad last dims to a multiple of this
SUBLANE = 8    # sublane width -> pad second-to-last dims to a multiple of this


# ----------------------------------------------------------------------------- kernel
def i2bgnn_kernel(
    # graph structure + node features
    adj_ref, x_ref, pool_ref,
    # GCN layer 0: lin weight [Cp,Dp], bias [1,Dp], eval-BN0 as scale/shift [1,Dp]
    w0_ref, b0_ref, s0_ref, t0_ref,
    # GCN layer 1: lin weight [Dp,Dp], bias [1,Dp]   (BN1 is folded into lin1)
    w1_ref, b1_ref,
    # lin1 (BN1 folded in) / lin2
    l1w_ref, l1b_ref, l2w_ref, l2b_ref,
    # classifier: Linear(D,D) -> ReLU -> Linear(D,C_out)
    c1w_ref, c1b_ref, c2w_ref, c2b_ref,
    # outputs
    x_out_ref, reps_ref, logits_ref,
):
    adj = adj_ref[...]                            # [Np, Np] bf16
    h = x_ref[...]                                # [Np, Cp] f32

    # ---- GCN layer 0: relu(Â @ (h W0) + b0), then eval BatchNorm as scale/shift ----
    p = jnp.dot(h, w0_ref[...], preferred_element_type=jnp.float32)
    h = jnp.dot(adj, p.astype(jnp.bfloat16),
                preferred_element_type=jnp.float32) + b0_ref[...]
    h = jnp.maximum(h, 0.0)
    h = h * s0_ref[...] + t0_ref[...]             # folded eval BN0 (no rsqrt in-kernel)
    # TODO(synk): Dropout is identity in eval mode; training-mode masking not implemented.

    # ---- GCN layer 1: relu(Â @ (h W1) + b1); BN1 folded into lin1 below ----
    p = jnp.dot(h, w1_ref[...], preferred_element_type=jnp.float32)
    h = jnp.dot(adj, p.astype(jnp.bfloat16),
                preferred_element_type=jnp.float32) + b1_ref[...]
    h = jnp.maximum(h, 0.0)

    # ---- lin1 (BN1 pre-folded) -> relu -> (dropout identity) -> lin2 ----
    h = jnp.maximum(
        jnp.dot(h, l1w_ref[...], preferred_element_type=jnp.float32) + l1b_ref[...], 0.0)
    x_out = jnp.dot(h, l2w_ref[...], preferred_element_type=jnp.float32) + l2b_ref[...]
    x_out_ref[...] = x_out

    # ---- global mean pool over nodes of each graph ----
    reps = jnp.dot(pool_ref[...], x_out, preferred_element_type=jnp.float32)
    reps_ref[...] = reps

    # ---- classifier head ----
    c = jnp.maximum(
        jnp.dot(reps, c1w_ref[...], preferred_element_type=jnp.float32) + c1b_ref[...], 0.0)
    logits_ref[...] = jnp.dot(c, c2w_ref[...], preferred_element_type=jnp.float32) + c2b_ref[...]


# ----------------------------------------------------------------------------- wrapper
def _round_up(x, m):
    return ((x + m - 1) // m) * m


def _pad2(a, rows, cols):
    return jnp.pad(a, ((0, rows - a.shape[0]), (0, cols - a.shape[1])))


def i2bgnn_forward(adj, x0, pool, params):
    N, Cin = x0.shape
    D = params["w1"].shape[0]
    G = pool.shape[0]
    C_out = params["c2w"].shape[1]

    Np = _round_up(N, SUBLANE)
    Cp = _round_up(Cin, LANE)
    Dp = _round_up(D, LANE)
    Op = _round_up(C_out, LANE)
    Gp = _round_up(G, SUBLANE)

    # ---- one-time constant folding of eval-mode BatchNorm (trace/compile time) ----
    s0 = params["g0"] * jax.lax.rsqrt(params["v0"] + BN_EPS)       # [1, D]
    t0 = params["be0"] - params["m0"] * s0
    s1 = params["g1"] * jax.lax.rsqrt(params["v1"] + BN_EPS)
    t1 = params["be1"] - params["m1"] * s1
    # BN1 folds exactly into lin1 (no aggregation in between):
    #   lin1(h*s1 + t1) = h @ (s1.T * W) + (t1 @ W + b)
    l1w = s1.T * params["l1w"]
    l1b = t1 @ params["l1w"] + params["l1b"]

    # ---- pad everything to lane/sublane-dense shapes (zeros are exact no-ops) ----
    inputs = (
        _pad2(adj, Np, Np).astype(jnp.bfloat16),        # bf16 adjacency for MXU
        _pad2(x0, Np, Cp),
        _pad2(pool, Gp, Np),
        _pad2(params["w0"], Cp, Dp), _pad2(params["b0"], 1, Dp),
        _pad2(s0, 1, Dp), _pad2(t0, 1, Dp),
        _pad2(params["w1"], Dp, Dp), _pad2(params["b1"], 1, Dp),
        _pad2(l1w, Dp, Dp), _pad2(l1b, 1, Dp),
        _pad2(params["l2w"], Dp, Dp), _pad2(params["l2b"], 1, Dp),
        _pad2(params["c1w"], Dp, Dp), _pad2(params["c1b"], 1, Dp),
        _pad2(params["c2w"], Dp, Op), _pad2(params["c2b"], 1, Op),
    )
    vmem = lambda: pl.BlockSpec(memory_space=pltpu.MemorySpace.VMEM)

    x_out_p, reps_p, logits_p = pl.pallas_call(
        i2bgnn_kernel,
        out_shape=(
            jax.ShapeDtypeStruct((Np, Dp), jnp.float32),   # per-node embeddings x
            jax.ShapeDtypeStruct((Gp, Dp), jnp.float32),   # graph_reps
            jax.ShapeDtypeStruct((Gp, Op), jnp.float32),   # classifier(graph_reps)
        ),
        in_specs=[vmem() for _ in inputs],
        out_specs=(vmem(), vmem(), vmem()),
    )(*inputs)

    # slice back to logical shapes (cheap XLA slices, fused under jit)
    return x_out_p[:N, :D], reps_p[:G, :D], logits_p[:G, :C_out]


# ----------------------------------------------------------------------- graph plumbing
def build_normalized_adjacency(edge_index, edge_weight, num_nodes):
    """Dense equivalent of PyG gcn_norm with add_remaining_self_loops semantics:
    existing self-loop edges keep their weight; nodes without one get weight 1."""
    row, col = edge_index[0], edge_index[1]             # messages flow row (src) -> col (dst)
    A = jnp.zeros((num_nodes, num_nodes), jnp.float32).at[col, row].add(edge_weight)
    has_self = jnp.zeros((num_nodes,), jnp.float32).at[row].add(
        jnp.where(row == col, 1.0, 0.0))
    A = A + jnp.diag(jnp.where(has_self > 0, 0.0, 1.0))  # remaining self-loops only
    deg = A.sum(axis=1)
    dinv = jnp.where(deg > 0, jax.lax.rsqrt(deg), 0.0)
    return dinv[:, None] * A * dinv[None, :]


def build_mean_pool(batch, num_graphs, num_nodes):
    onehot = (batch[None, :] == jnp.arange(num_graphs)[:, None]).astype(jnp.float32)  # [G, N]
    counts = jnp.maximum(onehot.sum(axis=1, keepdims=True), 1.0)
    return onehot / counts


def init_params(key, in_channels, dim, out_channels):
    ks = jax.random.split(key, 12)
    def lin(k, fan_in, fan_out):
        scale = 1.0 / jnp.sqrt(jnp.float32(fan_in))
        return jax.random.uniform(k, (fan_in, fan_out), jnp.float32, -scale, scale)
    p = {}
    # GCN layer 0 (PyG GCNConv lin has no bias; separate bias added after aggregation)
    p["w0"] = lin(ks[0], in_channels, dim)
    p["b0"] = jnp.zeros((1, dim), jnp.float32)
    p["g0"] = jnp.ones((1, dim), jnp.float32) + 0.01 * jax.random.normal(ks[1], (1, dim))
    p["be0"] = 0.01 * jax.random.normal(ks[2], (1, dim))
    p["m0"] = 0.05 * jax.random.normal(ks[3], (1, dim))
    p["v0"] = jnp.ones((1, dim), jnp.float32) + 0.1 * jax.random.uniform(ks[4], (1, dim))
    # GCN layer 1
    p["w1"] = lin(ks[5], dim, dim)
    p["b1"] = jnp.zeros((1, dim), jnp.float32)
    p["g1"] = jnp.ones((1, dim), jnp.float32)
    p["be1"] = jnp.zeros((1, dim), jnp.float32)
    p["m1"] = jnp.zeros((1, dim), jnp.float32)
    p["v1"] = jnp.ones((1, dim), jnp.float32)
    # lin1 / lin2
    p["l1w"] = lin(ks[6], dim, dim)
    p["l1b"] = 0.01 * jax.random.normal(ks[7], (1, dim))
    p["l2w"] = lin(ks[8], dim, dim)
    p["l2b"] = jnp.zeros((1, dim), jnp.float32)
    # classifier
    p["c1w"] = lin(ks[9], dim, dim)
    p["c1b"] = jnp.zeros((1, dim), jnp.float32)
    p["c2w"] = lin(ks[10], dim, out_channels)
    p["c2b"] = 0.01 * jax.random.normal(ks[11], (1, out_channels))
    return p


if __name__ == "__main__":
    key = jax.random.PRNGKey(0)
    N, E, G = 64, 256, 4            # nodes, edges, graphs
    IN_CH, DIM, OUT_CH = 8, 32, 4

    k_x, k_ei, k_ea, k_p = jax.random.split(key, 4)
    x = jax.random.normal(k_x, (N, IN_CH), jnp.float32)
    edge_index = jax.random.randint(k_ei, (2, E), 0, N, jnp.int32)
    edge_attr = jax.random.uniform(k_ea, (E, 2), jnp.float32, 0.1, 1.0)
    batch = jnp.repeat(jnp.arange(G, dtype=jnp.int32), N // G)

    # which_edge_weight is None (!= 'T') => edge_weight = edge_attr[:, 1]
    edge_weight = edge_attr[:, 1]

    adj = build_normalized_adjacency(edge_index, edge_weight, N)
    pool = build_mean_pool(batch, G, N)
    params = init_params(k_p, IN_CH, DIM, OUT_CH)

    fwd = jax.jit(i2bgnn_forward)
    x_out, graph_reps, logits = fwd(adj, x, pool, params)
    jax.block_until_ready((x_out, graph_reps, logits))

    assert x_out.shape == (N, DIM)
    assert graph_reps.shape == (G, DIM)
    assert logits.shape == (G, OUT_CH)
    assert bool(jnp.all(jnp.isfinite(x_out)))
    assert bool(jnp.all(jnp.isfinite(logits)))
    print("KERNEL_OK")
</pallas_src>

<mosaic_0001>
module attributes {stable_mosaic.version = 11 : i64} {
  func.func @i2bgnn_kernel(%arg0: memref<64x64xbf16, #tpu.memory_space<vmem>>, %arg1: memref<64x128xf32, #tpu.memory_space<vmem>>, %arg2: memref<8x64xf32, #tpu.memory_space<vmem>>, %arg3: memref<128x128xf32, #tpu.memory_space<vmem>>, %arg4: memref<1x128xf32, #tpu.memory_space<vmem>>, %arg5: memref<1x128xf32, #tpu.memory_space<vmem>>, %arg6: memref<1x128xf32, #tpu.memory_space<vmem>>, %arg7: memref<128x128xf32, #tpu.memory_space<vmem>>, %arg8: memref<1x128xf32, #tpu.memory_space<vmem>>, %arg9: memref<128x128xf32, #tpu.memory_space<vmem>>, %arg10: memref<1x128xf32, #tpu.memory_space<vmem>>, %arg11: memref<128x128xf32, #tpu.memory_space<vmem>>, %arg12: memref<1x128xf32, #tpu.memory_space<vmem>>, %arg13: memref<128x128xf32, #tpu.memory_space<vmem>>, %arg14: memref<1x128xf32, #tpu.memory_space<vmem>>, %arg15: memref<128x128xf32, #tpu.memory_space<vmem>>, %arg16: memref<1x128xf32, #tpu.memory_space<vmem>>, %arg17: memref<64x128xf32, #tpu.memory_space<vmem>>, %arg18: memref<8x128xf32, #tpu.memory_space<vmem>>, %arg19: memref<8x128xf32, #tpu.memory_space<vmem>>) attributes {dimension_semantics = [], scalar_prefetch = 0 : i64, scratch_operands = 0 : i64, tpu.core_type = #tpu.core_type<tc>} {
    %c0 = arith.constant 0 : index
    %c0_0 = arith.constant 0 : index
    %0 = vector.load %arg0[%c0, %c0_0] : memref<64x64xbf16, #tpu.memory_space<vmem>>, vector<64x64xbf16>
    %c0_1 = arith.constant 0 : index
    %c0_2 = arith.constant 0 : index
    %1 = vector.load %arg1[%c0_1, %c0_2] : memref<64x128xf32, #tpu.memory_space<vmem>>, vector<64x128xf32>
    %c0_3 = arith.constant 0 : index
    %c0_4 = arith.constant 0 : index
    %2 = vector.load %arg3[%c0_3, %c0_4] : memref<128x128xf32, #tpu.memory_space<vmem>>, vector<128x128xf32>
    %cst = arith.constant dense<0.000000e+00> : vector<64x128xf32>
    %3 = tpu.matmul %1, %2, %cst {dimension_numbers = #tpu.dot_dimension_numbers<[1], [0], [0], [1], [0, 0, 1, 1], [], []>} : vector<64x128xf32>, vector<128x128xf32>, vector<64x128xf32> -> vector<64x128xf32>
    %4 = arith.truncf %3 : vector<64x128xf32> to vector<64x128xbf16>
    %cst_5 = arith.constant dense<0.000000e+00> : vector<64x128xf32>
    %5 = tpu.matmul %0, %4, %cst_5 {dimension_numbers = #tpu.dot_dimension_numbers<[1], [0], [0], [1], [0, 0, 1, 1], [], []>} : vector<64x64xbf16>, vector<64x128xbf16>, vector<64x128xf32> -> vector<64x128xf32>
    %c0_6 = arith.constant 0 : index
    %c0_7 = arith.constant 0 : index
    %6 = vector.load %arg4[%c0_6, %c0_7] : memref<1x128xf32, #tpu.memory_space<vmem>>, vector<1x128xf32>
    %7 = vector.broadcast %6 : vector<1x128xf32> to vector<64x128xf32>
    %8 = arith.addf %5, %7 : vector<64x128xf32>
    %cst_8 = arith.constant 0.000000e+00 : f32
    %9 = vector.broadcast %cst_8 : f32 to vector<64x128xf32>
    %10 = arith.maximumf %8, %9 : vector<64x128xf32>
    %c0_9 = arith.constant 0 : index
    %c0_10 = arith.constant 0 : index
    %11 = vector.load %arg5[%c0_9, %c0_10] : memref<1x128xf32, #tpu.memory_space<vmem>>, vector<1x128xf32>
    %12 = vector.broadcast %11 : vector<1x128xf32> to vector<64x128xf32>
    %13 = arith.mulf %10, %12 : vector<64x128xf32>
    %c0_11 = arith.constant 0 : index
    %c0_12 = arith.constant 0 : index
    %14 = vector.load %arg6[%c0_11, %c0_12] : memref<1x128xf32, #tpu.memory_space<vmem>>, vector<1x128xf32>
    %15 = vector.broadcast %14 : vector<1x128xf32> to vector<64x128xf32>
    %16 = arith.addf %13, %15 : vector<64x128xf32>
    %c0_13 = arith.constant 0 : index
    %c0_14 = arith.constant 0 : index
    %17 = vector.load %arg7[%c0_13, %c0_14] : memref<128x128xf32, #tpu.memory_space<vmem>>, vector<128x128xf32>
    %cst_15 = arith.constant dense<0.000000e+00> : vector<64x128xf32>
    %18 = tpu.matmul %16, %17, %cst_15 {dimension_numbers = #tpu.dot_dimension_numbers<[1], [0], [0], [1], [0, 0, 1, 1], [], []>} : vector<64x128xf32>, vector<128x128xf32>, vector<64x128xf32> -> vector<64x128xf32>
    %19 = arith.truncf %18 : vector<64x128xf32> to vector<64x128xbf16>
    %cst_16 = arith.constant dense<0.000000e+00> : vector<64x128xf32>
    %20 = tpu.matmul %0, %19, %cst_16 {dimension_numbers = #tpu.dot_dimension_numbers<[1], [0], [0], [1], [0, 0, 1, 1], [], []>} : vector<64x64xbf16>, vector<64x128xbf16>, vector<64x128xf32> -> vector<64x128xf32>
    %c0_17 = arith.constant 0 : index
    %c0_18 = arith.constant 0 : index
    %21 = vector.load %arg8[%c0_17, %c0_18] : memref<1x128xf32, #tpu.memory_space<vmem>>, vector<1x128xf32>
    %22 = vector.broadcast %21 : vector<1x128xf32> to vector<64x128xf32>
    %23 = arith.addf %20, %22 : vector<64x128xf32>
    %cst_19 = arith.constant 0.000000e+00 : f32
    %24 = vector.broadcast %cst_19 : f32 to vector<64x128xf32>
    %25 = arith.maximumf %23, %24 : vector<64x128xf32>
    %c0_20 = arith.constant 0 : index
    %c0_21 = arith.constant 0 : index
    %26 = vector.load %arg9[%c0_20, %c0_21] : memref<128x128xf32, #tpu.memory_space<vmem>>, vector<128x128xf32>
    %cst_22 = arith.constant dense<0.000000e+00> : vector<64x128xf32>
    %27 = tpu.matmul %25, %26, %cst_22 {dimension_numbers = #tpu.dot_dimension_numbers<[1], [0], [0], [1], [0, 0, 1, 1], [], []>} : vector<64x128xf32>, vector<128x128xf32>, vector<64x128xf32> -> vector<64x128xf32>
    %c0_23 = arith.constant 0 : index
    %c0_24 = arith.constant 0 : index
    %28 = vector.load %arg10[%c0_23, %c0_24] : memref<1x128xf32, #tpu.memory_space<vmem>>, vector<1x128xf32>
    %29 = vector.broadcast %28 : vector<1x128xf32> to vector<64x128xf32>
    %30 = arith.addf %27, %29 : vector<64x128xf32>
    %cst_25 = arith.constant 0.000000e+00 : f32
    %31 = vector.broadcast %cst_25 : f32 to vector<64x128xf32>
    %32 = arith.maximumf %30, %31 : vector<64x128xf32>
    %c0_26 = arith.constant 0 : index
    %c0_27 = arith.constant 0 : index
    %33 = vector.load %arg11[%c0_26, %c0_27] : memref<128x128xf32, #tpu.memory_space<vmem>>, vector<128x128xf32>
    %cst_28 = arith.constant dense<0.000000e+00> : vector<64x128xf32>
    %34 = tpu.matmul %32, %33, %cst_28 {dimension_numbers = #tpu.dot_dimension_numbers<[1], [0], [0], [1], [0, 0, 1, 1], [], []>} : vector<64x128xf32>, vector<128x128xf32>, vector<64x128xf32> -> vector<64x128xf32>
    %c0_29 = arith.constant 0 : index
    %c0_30 = arith.constant 0 : index
    %35 = vector.load %arg12[%c0_29, %c0_30] : memref<1x128xf32, #tpu.memory_space<vmem>>, vector<1x128xf32>
    %36 = vector.broadcast %35 : vector<1x128xf32> to vector<64x128xf32>
    %37 = arith.addf %34, %36 : vector<64x128xf32>
    %c0_31 = arith.constant 0 : index
    %c0_32 = arith.constant 0 : index
    %38 = vector.load %arg17[%c0_31, %c0_32] : memref<64x128xf32, #tpu.memory_space<vmem>>, vector<64x128xf32>
    tpu.vector_store %arg17[%c0_31, %c0_32], %37 {strides = array<i32>} : memref<64x128xf32, #tpu.memory_space<vmem>>, vector<64x128xf32>,
    %c0_33 = arith.constant 0 : index
    %c0_34 = arith.constant 0 : index
    %39 = vector.load %arg2[%c0_33, %c0_34] : memref<8x64xf32, #tpu.memory_space<vmem>>, vector<8x64xf32>
    %cst_35 = arith.constant dense<0.000000e+00> : vector<8x128xf32>
    %40 = tpu.matmul %39, %37, %cst_35 {dimension_numbers = #tpu.dot_dimension_numbers<[1], [0], [0], [1], [0, 0, 1, 1], [], []>} : vector<8x64xf32>, vector<64x128xf32>, vector<8x128xf32> -> vector<8x128xf32>
    %c0_36 = arith.constant 0 : index
    %c0_37 = arith.constant 0 : index
    %41 = vector.load %arg18[%c0_36, %c0_37] : memref<8x128xf32, #tpu.memory_space<vmem>>, vector<8x128xf32>
    tpu.vector_store %arg18[%c0_36, %c0_37], %40 {strides = array<i32>} : memref<8x128xf32, #tpu.memory_space<vmem>>, vector<8x128xf32>,
    %c0_38 = arith.constant 0 : index
    %c0_39 = arith.constant 0 : index
    %42 = vector.load %arg13[%c0_38, %c0_39] : memref<128x128xf32, #tpu.memory_space<vmem>>, vector<128x128xf32>
    %cst_40 = arith.constant dense<0.000000e+00> : vector<8x128xf32>
    %43 = tpu.matmul %40, %42, %cst_40 {dimension_numbers = #tpu.dot_dimension_numbers<[1], [0], [0], [1], [0, 0, 1, 1], [], []>} : vector<8x128xf32>, vector<128x128xf32>, vector<8x128xf32> -> vector<8x128xf32>
    %c0_41 = arith.constant 0 : index
    %c0_42 = arith.constant 0 : index
    %44 = vector.load %arg14[%c0_41, %c0_42] : memref<1x128xf32, #tpu.memory_space<vmem>>, vector<1x128xf32>
    %45 = vector.broadcast %44 : vector<1x128xf32> to vector<8x128xf32>
    %46 = arith.addf %43, %45 : vector<8x128xf32>
    %cst_43 = arith.constant 0.000000e+00 : f32
    %47 = vector.broadcast %cst_43 : f32 to vector<8x128xf32>
    %48 = arith.maximumf %46, %47 : vector<8x128xf32>
    %c0_44 = arith.constant 0 : index
    %c0_45 = arith.constant 0 : index
    %49 = vector.load %arg15[%c0_44, %c0_45] : memref<128x128xf32, #tpu.memory_space<vmem>>, vector<128x128xf32>
    %cst_46 = arith.constant dense<0.000000e+00> : vector<8x128xf32>
    %50 = tpu.matmul %48, %49, %cst_46 {dimension_numbers = #tpu.dot_dimension_numbers<[1], [0], [0], [1], [0, 0, 1, 1], [], []>} : vector<8x128xf32>, vector<128x128xf32>, vector<8x128xf32> -> vector<8x128xf32>
    %c0_47 = arith.constant 0 : index
    %c0_48 = arith.constant 0 : index
    %51 = vector.load %arg16[%c0_47, %c0_48] : memref<1x128xf32, #tpu.memory_space<vmem>>, vector<1x128xf32>
    %52 = vector.broadcast %51 : vector<1x128xf32> to vector<8x128xf32>
    %53 = arith.addf %50, %52 : vector<8x128xf32>
    %c0_49 = arith.constant 0 : index
    %c0_50 = arith.constant 0 : index
    %54 = vector.load %arg19[%c0_49, %c0_50] : memref<8x128xf32, #tpu.memory_space<vmem>>, vector<8x128xf32>
    tpu.vector_store %arg19[%c0_49, %c0_50], %53 {strides = array<i32>} : memref<8x128xf32, #tpu.memory_space<vmem>>, vector<8x128xf32>,
    return
  }
}

</mosaic_0001>

<llo_original>
// kernel: i2bgnn_forward.1
$region0: #{i2bgnn_forward.1}
  #allocation0 [shape = 'u32[]', space=smem, size = 0x4, offset = 0x4, fixed_abs, tag = 'smem constant byte address 0x4 - core index']
  #allocation1 [shape = 'u32[144,128]{1,0:T(1,128)}', space=vmem, size = 0x12000, scoped, tag = 'internal scratch']
  %s0 = inlined_call_operand.vmem [shape: bf16[64,64], index: 0, kind: input, shape index: {}]
  %s1 = inlined_call_operand.vmem [shape: f32[64,128], index: 1, kind: input, shape index: {}]
  %s2 = inlined_call_operand.vmem [shape: f32[8,64], index: 2, kind: input, shape index: {}]
  %s3 = inlined_call_operand.vmem [shape: f32[128,128], index: 3, kind: input, shape index: {}]
  %s4 = inlined_call_operand.vmem [shape: f32[1,128], index: 4, kind: input, shape index: {}]
  %s5 = inlined_call_operand.vmem [shape: f32[1,128], index: 5, kind: input, shape index: {}]
  %s6 = inlined_call_operand.vmem [shape: f32[1,128], index: 6, kind: input, shape index: {}]
  %s7 = inlined_call_operand.vmem [shape: f32[128,128], index: 7, kind: input, shape index: {}]
  %s8 = inlined_call_operand.vmem [shape: f32[1,128], index: 8, kind: input, shape index: {}]
  %s9 = inlined_call_operand.vmem [shape: f32[128,128], index: 9, kind: input, shape index: {}]
  %s10 = inlined_call_operand.vmem [shape: f32[1,128], index: 10, kind: input, shape index: {}]
  %s11 = inlined_call_operand.vmem [shape: f32[128,128], index: 11, kind: input, shape index: {}]
  %s12 = inlined_call_operand.vmem [shape: f32[1,128], index: 12, kind: input, shape index: {}]
  %s13 = inlined_call_operand.vmem [shape: f32[128,128], index: 13, kind: input, shape index: {}]
  %s14 = inlined_call_operand.vmem [shape: f32[1,128], index: 14, kind: input, shape index: {}]
  %s15 = inlined_call_operand.vmem [shape: f32[128,128], index: 15, kind: input, shape index: {}]
  %s16 = inlined_call_operand.vmem [shape: f32[1,128], index: 16, kind: input, shape index: {}]
  %s17 = inlined_call_operand.vmem [shape: f32[64,128], index: 17, kind: output, shape index: {0}]
  %s18 = inlined_call_operand.vmem [shape: f32[8,128], index: 18, kind: output, shape index: {1}]
  %s19 = inlined_call_operand.vmem [shape: f32[8,128], index: 19, kind: output, shape index: {2}]
  %20 = xla_tuple %s17, %s18, %s19
  %s21 = sld [smem:[#allocation0]]
  $region94: #{i2bgnn_forward.1} parent=0
    _
  %s23 = ssub.s32 1, %s21
  %s24 = scalar_select 0, %s23, %s21
  // Predicated region
  $region2: #{i2bgnn_forward.1} parent=0 // pred_check
    _
  $region3: #{i2bgnn_forward.1} parent=0 // pred_check_branch
    %26 = sbr.rel (0) target = $region5
  $region4: #{i2bgnn_forward.1} parent=0 // pred_region
    _
  $region5: #{i2bgnn_forward.1} parent=0 // pred_fallthru
    _
  // Predicated region
  $region6: #{i2bgnn_forward.1} parent=0 // pred_check
    _
  $region7: #{i2bgnn_forward.1} parent=0 // pred_check_branch
    %28 = sbr.rel (0) target = $region9
  $region8: #{i2bgnn_forward.1} parent=0 // pred_region
    _
  $region9: #{i2bgnn_forward.1} parent=0 // pred_fallthru
    _
  // Predicated region
  $region10: #{i2bgnn_forward.1} parent=0 // pred_check
    _
  $region11: #{i2bgnn_forward.1} parent=0 // pred_check_branch
    %30 = sbr.rel (0) target = $region13
  $region12: #{i2bgnn_forward.1} parent=0 // pred_region
    _
  $region13: #{i2bgnn_forward.1} parent=0 // pred_fallthru
    _
  // Predicated region
  $region14: #{i2bgnn_forward.1} parent=0 // pred_check
    _
  $region15: #{i2bgnn_forward.1} parent=0 // pred_check_branch
    %32 = sbr.rel (0) target = $region17
  $region16: #{i2bgnn_forward.1} parent=0 // pred_region
    _
  $region17: #{i2bgnn_forward.1} parent=0 // pred_fallthru
    _
  // Predicated region
  $region18: #{i2bgnn_forward.1} parent=0 // pred_check
    _
  $region19: #{i2bgnn_forward.1} parent=0 // pred_check_branch
    %34 = sbr.rel (0) target = $region21
  $region20: #{i2bgnn_forward.1} parent=0 // pred_region
    _
  $region21: #{i2bgnn_forward.1} parent=0 // pred_fallthru
    _
  // Predicated region
  $region22: #{i2bgnn_forward.1} parent=0 // pred_check
    _
  $region23: #{i2bgnn_forward.1} parent=0 // pred_check_branch
    %36 = sbr.rel (0) target = $region25
  $region24: #{i2bgnn_forward.1} parent=0 // pred_region
    _
  $region25: #{i2bgnn_forward.1} parent=0 // pred_fallthru
    _
  // Predicated region
  $region26: #{i2bgnn_forward.1} parent=0 // pred_check
    _
  $region27: #{i2bgnn_forward.1} parent=0 // pred_check_branch
    %38 = sbr.rel (0) target = $region29
  $region28: #{i2bgnn_forward.1} parent=0 // pred_region
    _
  $region29: #{i2bgnn_forward.1} parent=0 // pred_fallthru
    _
  // Predicated region
  $region30: #{i2bgnn_forward.1} parent=0 // pred_check
    _
  $region31: #{i2bgnn_forward.1} parent=0 // pred_check_branch
    %40 = sbr.rel (0) target = $region33
  $region32: #{i2bgnn_forward.1} parent=0 // pred_region
    _
  $region33: #{i2bgnn_forward.1} parent=0 // pred_fallthru
    _
  // Predicated region
  $region34: #{i2bgnn_forward.1} parent=0 // pred_check
    _
  $region35: #{i2bgnn_forward.1} parent=0 // pred_check_branch
    %42 = sbr.rel (0) target = $region37
  $region36: #{i2bgnn_forward.1} parent=0 // pred_region
    _
  $region37: #{i2bgnn_forward.1} parent=0 // pred_fallthru
    _
  // Predicated region
  $region38: #{i2bgnn_forward.1} parent=0 // pred_check
    _
  $region39: #{i2bgnn_forward.1} parent=0 // pred_check_branch
    %44 = sbr.rel (0) target = $region41
  $region40: #{i2bgnn_forward.1} parent=0 // pred_region
    _
  $region41: #{i2bgnn_forward.1} parent=0 // pred_fallthru
    _
  // Predicated region
  $region42: #{i2bgnn_forward.1} parent=0 // pred_check
    _
  $region43: #{i2bgnn_forward.1} parent=0 // pred_check_branch
    %46 = sbr.rel (0) target = $region45
  $region44: #{i2bgnn_forward.1} parent=0 // pred_region
    _
  $region45: #{i2bgnn_forward.1} parent=0 // pred_fallthru
    _
  // Predicated region
  $region46: #{i2bgnn_forward.1} parent=0 // pred_check
    _
  $region47: #{i2bgnn_forward.1} parent=0 // pred_check_branch
    %48 = sbr.rel (0) target = $region49
  $region48: #{i2bgnn_forward.1} parent=0 // pred_region
    _
  $region49: #{i2bgnn_forward.1} parent=0 // pred_fallthru
    _
  // Predicated region
  $region50: #{i2bgnn_forward.1} parent=0 // pred_check
    _
  $region51: #{i2bgnn_forward.1} parent=0 // pred_check_branch
    %50 = sbr.rel (0) target = $region53
  $region52: #{i2bgnn_forward.1} parent=0 // pred_region
    _
  $region53: #{i2bgnn_forward.1} parent=0 // pred_fallthru
    _
  // Predicated region
  $region54: #{i2bgnn_forward.1} parent=0 // pred_check
    _
  $region55: #{i2bgnn_forward.1} parent=0 // pred_check_branch
    %52 = sbr.rel (0) target = $region57
  $region56: #{i2bgnn_forward.1} parent=0 // pred_region
    _
  $region57: #{i2bgnn_forward.1} parent=0 // pred_fallthru
    _
  // Predicated region
  $region58: #{i2bgnn_forward.1} parent=0 // pred_check
    _
  $region59: #{i2bgnn_forward.1} parent=0 // pred_check_branch
    %54 = sbr.rel (0) target = $region61
  $region60: #{i2bgnn_forward.1} parent=0 // pred_region
    _
  $region61: #{i2bgnn_forward.1} parent=0 // pred_fallthru
    _
  // Predicated region
  $region62: #{i2bgnn_forward.1} parent=0 // pred_check
    _
  $region63: #{i2bgnn_forward.1} parent=0 // pred_check_branch
    %56 = sbr.rel (0) target = $region65
  $region64: #{i2bgnn_forward.1} parent=0 // pred_region
    _
  $region65: #{i2bgnn_forward.1} parent=0 // pred_fallthru
    _
  // Predicated region
  $region66: #{i2bgnn_forward.1} parent=0 // pred_check
    _
  $region67: #{i2bgnn_forward.1} parent=0 // pred_check_branch
    %58 = sbr.rel (0) target = $region69
  $region68: #{i2bgnn_forward.1} parent=0 // pred_region
    _
  $region69: #{i2bgnn_forward.1} parent=0 // pred_fallthru
    _
  %v60 = vld [vmem:[%s0] sm:$0xf]
  %v61 = vld [vmem:[%s0 + $0x4] sm:$0xf]
  %v62 = vld [vmem:[%s0 + $0x8] sm:$0xf]
  %v63 = vld [vmem:[%s0 + $0xc] sm:$0xf]
  %v64 = vld [vmem:[%s0 + $0x10] sm:$0xf]
  %v65 = vld [vmem:[%s0 + $0x14] sm:$0xf]
  %v66 = vld [vmem:[%s0 + $0x18] sm:$0xf]
  %v67 = vld [vmem:[%s0 + $0x1c] sm:$0xf]
  %v68 = vld [vmem:[%s1] sm:$0xff]
  %v69 = vld [vmem:[%s1 + $0x8] sm:$0xff]
  %v70 = vld [vmem:[%s1 + $0x10] sm:$0xff]
  %v71 = vld [vmem:[%s1 + $0x18] sm:$0xff]
  %v72 = vld [vmem:[%s1 + $0x20] sm:$0xff]
  %v73 = vld [vmem:[%s1 + $0x28] sm:$0xff]
  %v74 = vld [vmem:[%s1 + $0x30] sm:$0xff]
  %v75 = vld [vmem:[%s1 + $0x38] sm:$0xff]
  %v76 = vld [vmem:[%s3] sm:$0xff]
  %v77 = vld [vmem:[%s3 + $0x8] sm:$0xff]
  %v78 = vld [vmem:[%s3 + $0x10] sm:$0xff]
  %v79 = vld [vmem:[%s3 + $0x18] sm:$0xff]
  %v80 = vld [vmem:[%s3 + $0x20] sm:$0xff]
  %v81 = vld [vmem:[%s3 + $0x28] sm:$0xff]
  %v82 = vld [vmem:[%s3 + $0x30] sm:$0xff]
  %v83 = vld [vmem:[%s3 + $0x38] sm:$0xff]
  %v84 = vld [vmem:[%s3 + $0x40] sm:$0xff]
  %v85 = vld [vmem:[%s3 + $0x48] sm:$0xff]
  %v86 = vld [vmem:[%s3 + $0x50] sm:$0xff]
  %v87 = vld [vmem:[%s3 + $0x58] sm:$0xff]
  %v88 = vld [vmem:[%s3 + $0x60] sm:$0xff]
  %v89 = vld [vmem:[%s3 + $0x68] sm:$0xff]
  %v90 = vld [vmem:[%s3 + $0x70] sm:$0xff]
  %v91 = vld [vmem:[%s3 + $0x78] sm:$0xff]
  %92 = vmatprep.subr.mxu0 0.0
  %93 = vmatpush1.msra.mxu0 %v76
  %94 = vmatprep.subr.mxu0 0.0
  %95 = vmatpush1.msra.mxu0 %v77
  %96 = vmatprep.subr.mxu0 0.0
  %97 = vmatpush1.msra.mxu0 %v78
  %98 = vmatprep.subr.mxu0 0.0
  %99 = vmatpush1.msra.mxu0 %v79
  %100 = vmatprep.subr.mxu0 0.0
  %101 = vmatpush1.msra.mxu0 %v80
  %102 = vmatprep.subr.mxu0 0.0
  %103 = vmatpush1.msra.mxu0 %v81
  %104 = vmatprep.subr.mxu0 0.0
  %105 = vmatpush1.msra.mxu0 %v82
  %106 = vmatprep.subr.mxu0 0.0
  %107 = vmatpush1.msra.mxu0 %v83
  %108 = vmatprep.subr.mxu0 0.0
  %109 = vmatpush1.msra.mxu0 %v84
  %110 = vmatprep.subr.mxu0 0.0
  %111 = vmatpush1.msra.mxu0 %v85
  %112 = vmatprep.subr.mxu0 0.0
  %113 = vmatpush1.msra.mxu0 %v86
  %114 = vmatprep.subr.mxu0 0.0
  %115 = vmatpush1.msra.mxu0 %v87
  %116 = vmatprep.subr.mxu0 0.0
  %117 = vmatpush1.msra.mxu0 %v88
  %118 = vmatprep.subr.mxu0 0.0
  %119 = vmatpush1.msra.mxu0 %v89
  %120 = vmatprep.subr.mxu0 0.0
  %121 = vmatpush1.msra.mxu0 %v90
  %122 = vmatprep.subr.mxu0 0.0
  %123 = vmatpush1.msra.mxu0 %v91
  %124 = vmatprep.subr.mxu0 0.0
  %125 = vmatpush1.msra.mxu0 0.0
  %126 = vmatprep.subr.mxu0 0.0
  %127 = vmatpush1.msra.mxu0 0.0
  %128 = vmatprep.subr.mxu0 0.0
  %129 = vmatpush1.msra.mxu0 0.0
  %130 = vmatprep.subr.mxu0 0.0
  %131 = vmatpush1.msra.mxu0 0.0
  %132 = vmatprep.subr.mxu0 0.0
  %133 = vmatpush1.msra.mxu0 0.0
  %134 = vmatprep.subr.mxu0 0.0
  %135 = vmatpush1.msra.mxu0 0.0
  %136 = vmatprep.subr.mxu0 0.0
  %137 = vmatpush1.msra.mxu0 0.0
  %138 = vmatprep.subr.mxu0 0.0
  %139 = vmatpush1.msra.mxu0 0.0
  %140 = vmatprep.subr.mxu0 0.0
  %141 = vmatpush1.msra.mxu0 0.0
  %142 = vmatprep.subr.mxu0 0.0
  %143 = vmatpush1.msra.mxu0 0.0
  %144 = vmatprep.subr.mxu0 0.0
  %145 = vmatpush1.msra.mxu0 0.0
  %146 = vmatprep.subr.mxu0 0.0
  %147 = vmatpush1.msra.mxu0 0.0
  %148 = vmatprep.subr.mxu0 0.0
  %149 = vmatpush1.msra.mxu0 0.0
  %150 = vmatprep.subr.mxu0 0.0
  %151 = vmatpush1.msra.mxu0 0.0
  %152 = vmatprep.subr.mxu0 0.0
  %153 = vmatpush1.msra.mxu0 0.0
  %154 = vmatprep.subr.mxu0 0.0
  %155 = vmatpush1.msra.mxu0 0.0
  %156 = vmatprep.mubr.f32.mxu0 0.0
  %157 = vmatmul.mubr.f32.gmra.mrb[0].mxu0 %v68
  %v158 = vpop.f32.mrb[0].mxu0
  %v159 = vadd.f32 0.0, %v158
  %v160 = vpop.f32.mrb[0].mxu0
  %161 = vmatprep.mubr.f32.mxu0 0.0
  %162 = vmatmul.mubr.f32.gmra.mrb[0].mxu0 %v69
  %v163 = vpop.f32.mrb[0].mxu0
  %v164 = vadd.f32 0.0, %v163
  %v165 = vpop.f32.mrb[0].mxu0
  %166 = vmatprep.mubr.f32.mxu0 0.0
  %167 = vmatmul.mubr.f32.gmra.mrb[0].mxu0 %v70
  %v168 = vpop.f32.mrb[0].mxu0
  %v169 = vadd.f32 0.0, %v168
  %v170 = vpop.f32.mrb[0].mxu0
  %171 = vmatprep.mubr.f32.mxu0 0.0
  %172 = vmatmul.mubr.f32.gmra.mrb[0].mxu0 %v71
  %v173 = vpop.f32.mrb[0].mxu0
  %v174 = vadd.f32 0.0, %v173
  %v175 = vpop.f32.mrb[0].mxu0
  %176 = vmatprep.mubr.f32.mxu0 0.0
  %177 = vmatmul.mubr.f32.gmra.mrb[0].mxu0 %v72
  %v178 = vpop.f32.mrb[0].mxu0
  %v179 = vadd.f32 0.0, %v178
  %v180 = vpop.f32.mrb[0].mxu0
  %181 = vmatprep.mubr.f32.mxu0 0.0
  %182 = vmatmul.mubr.f32.gmra.mrb[0].mxu0 %v73
  %v183 = vpop.f32.mrb[0].mxu0
  %v184 = vadd.f32 0.0, %v183
  %v185 = vpop.f32.mrb[0].mxu0
  %186 = vmatprep.mubr.f32.mxu0 0.0
  %187 = vmatmul.mubr.f32.gmra.mrb[0].mxu0 %v74
  %v188 = vpop.f32.mrb[0].mxu0
  %v189 = vadd.f32 0.0, %v188
  %v190 = vpop.f32.mrb[0].mxu0
  %191 = vmatprep.mubr.f32.mxu0 0.0
  %192 = vmatmul.mubr.f32.gmra.mrb[0].mxu0 %v75
  %v193 = vpop.f32.mrb[0].mxu0
  %v194 = vadd.f32 0.0, %v193
  %v195 = vpop.f32.mrb[0].mxu0
  %196 = vdwg.mxu0
  %v197 = vpack.c.bf16 %v164, %v159
  %v198 = vpack.c.bf16 %v174, %v169
  %v199 = vpack.c.bf16 %v184, %v179
  %v200 = vpack.c.bf16 %v194, %v189
  %v201 = vld [vmem:[%s4] sm:$0x1]
  %v203 = vlaneseq
  %v204 = vshrl.u32 %v203, 7
  %v205 = vsub.s32 0, %v204
  %v206 = vrot.slane %v201, %v205
  %v216 = vunpack.c.l.b16 %v60
  %v217 = vunpack.c.l.b16 %v61
  %v218 = vunpack.c.l.b16 %v62
  %v219 = vunpack.c.l.b16 %v63
  %v220 = vunpack.c.l.b16 %v64
  %v221 = vunpack.c.l.b16 %v65
  %v222 = vunpack.c.l.b16 %v66
  %v223 = vunpack.c.l.b16 %v67
  %v224 = vpack.c.b16 %v217, %v216
  %v225 = vpack.c.b16 %v219, %v218
  %v226 = vpack.c.b16 %v221, %v220
  %v227 = vpack.c.b16 %v223, %v222
  %vm228 = vcmask 523264
  %v230 = vsel %vm228, %v224, 0
  %v233 = vsel %vm228, %v225, 0
  %v236 = vsel %vm228, %v226, 0
  %v239 = vsel %vm228, %v227, 0
  %241 = vmatprep.subr.bf16.mxu0 0
  %242 = vmatpush1.bf16.msra.mxu0 %v197
  %243 = vmatprep.subr.bf16.mxu0 0
  %244 = vmatpush1.bf16.msra.mxu0 %v198
  %245 = vmatprep.subr.bf16.mxu0 0
  %246 = vmatpush1.bf16.msra.mxu0 %v199
  %247 = vmatprep.subr.bf16.mxu0 0
  %248 = vmatpush1.bf16.msra.mxu0 %v200
  %249 = vmatprep.subr.bf16.mxu0 0
  %250 = vmatpush1.bf16.msra.mxu0 0
  %251 = vmatprep.subr.bf16.mxu0 0
  %252 = vmatpush1.bf16.msra.mxu0 0
  %253 = vmatprep.subr.bf16.mxu0 0
  %254 = vmatpush1.bf16.msra.mxu0 0
  %255 = vmatprep.subr.bf16.mxu0 0
  %256 = vmatpush1.bf16.msra.mxu0 0
  %257 = vmatprep.subr.bf16.mxu0 0
  %258 = vmatpush1.bf16.msra.mxu0 0
  %259 = vmatprep.subr.bf16.mxu0 0
  %260 = vmatpush1.bf16.msra.mxu0 0
  %261 = vmatprep.subr.bf16.mxu0 0
  %262 = vmatpush1.bf16.msra.mxu0 0
  %263 = vmatprep.subr.bf16.mxu0 0
  %264 = vmatpush1.bf16.msra.mxu0 0
  %265 = vmatprep.subr.bf16.mxu0 0
  %266 = vmatpush1.bf16.msra.mxu0 0
  %267 = vmatprep.subr.bf16.mxu0 0
  %268 = vmatpush1.bf16.msra.mxu0 0
  %269 = vmatprep.subr.bf16.mxu0 0
  %270 = vmatpush1.bf16.msra.mxu0 0
  %271 = vmatprep.subr.bf16.mxu0 0
  %272 = vmatpush1.bf16.msra.mxu0 0
  %273 = vmatprep.mubr.bf16.mxu0 0
  %274 = vmatmul.mubr.bf16.gmra.mrb[0].mxu0 %v230
  %v275 = vpop.f32.mrb[0].mxu0
  %v276 = vadd.f32 %v206, %v275
  %v277 = vpop.f32.mrb[0].mxu0
  %v278 = vpop.f32.mrb[0].mxu0
  %v279 = vadd.f32 %v206, %v278
  %v280 = vpop.f32.mrb[0].mxu0
  %281 = vmatprep.mubr.bf16.mxu0 0
  %282 = vmatmul.mubr.bf16.gmra.mrb[0].mxu0 %v233
  %v283 = vpop.f32.mrb[0].mxu0
  %v284 = vadd.f32 %v206, %v283
  %v285 = vpop.f32.mrb[0].mxu0
  %v286 = vpop.f32.mrb[0].mxu0
  %v287 = vadd.f32 %v206, %v286
  %v288 = vpop.f32.mrb[0].mxu0
  %289 = vmatprep.mubr.bf16.mxu0 0
  %290 = vmatmul.mubr.bf16.gmra.mrb[0].mxu0 %v236
  %v291 = vpop.f32.mrb[0].mxu0
  %v292 = vadd.f32 %v206, %v291
  %v293 = vpop.f32.mrb[0].mxu0
  %v294 = vpop.f32.mrb[0].mxu0
  %v295 = vadd.f32 %v206, %v294
  %v296 = vpop.f32.mrb[0].mxu0
  %297 = vmatprep.mubr.bf16.mxu0 0
  %298 = vmatmul.mubr.bf16.gmra.mrb[0].mxu0 %v239
  %v299 = vpop.f32.mrb[0].mxu0
  %v300 = vadd.f32 %v206, %v299
  %v301 = vpop.f32.mrb[0].mxu0
  %v302 = vpop.f32.mrb[0].mxu0
  %v303 = vadd.f32 %v206, %v302
  %v304 = vpop.f32.mrb[0].mxu0
  %305 = vdwg.mxu0
  %v306 = vmax.f32 %v276, 0.0
  %v307 = vmax.f32 %v279, 0.0
  %v308 = vmax.f32 %v284, 0.0
  %v309 = vmax.f32 %v287, 0.0
  %v310 = vmax.f32 %v292, 0.0
  %v311 = vmax.f32 %v295, 0.0
  %v312 = vmax.f32 %v300, 0.0
  %v313 = vmax.f32 %v303, 0.0
  %v314 = vld [vmem:[%s5] sm:$0x1]
  %v316 = vlaneseq
  %v317 = vshrl.u32 %v316, 7
  %v318 = vsub.s32 0, %v317
  %v319 = vrot.slane %v314, %v318
  %v321 = vmul.f32 %v306, %v319
  %v322 = vmul.f32 %v307, %v319
  %v323 = vmul.f32 %v308, %v319
  %v324 = vmul.f32 %v309, %v319
  %v325 = vmul.f32 %v310, %v319
  %v326 = vmul.f32 %v311, %v319
  %v327 = vmul.f32 %v312, %v319
  %v328 = vmul.f32 %v313, %v319
  %v329 = vld [vmem:[%s6] sm:$0x1]
  %v331 = vlaneseq
  %v332 = vshrl.u32 %v331, 7
  %v333 = vsub.s32 0, %v332
  %v334 = vrot.slane %v329, %v333
  %v336 = vadd.f32 %v321, %v334
  %v337 = vadd.f32 %v322, %v334
  %v338 = vadd.f32 %v323, %v334
  %v339 = vadd.f32 %v324, %v334
  %v340 = vadd.f32 %v325, %v334
  %v341 = vadd.f32 %v326, %v334
  %v342 = vadd.f32 %v327, %v334
  %v343 = vadd.f32 %v328, %v334
  %v344 = vld [vmem:[%s7] sm:$0xff]
  %v345 = vld [vmem:[%s7 + $0x8] sm:$0xff]
  %v346 = vld [vmem:[%s7 + $0x10] sm:$0xff]
  %v347 = vld [vmem:[%s7 + $0x18] sm:$0xff]
  %v348 = vld [vmem:[%s7 + $0x20] sm:$0xff]
  %v349 = vld [vmem:[%s7 + $0x28] sm:$0xff]
  %v350 = vld [vmem:[%s7 + $0x30] sm:$0xff]
  %v351 = vld [vmem:[%s7 + $0x38] sm:$0xff]
  %v352 = vld [vmem:[%s7 + $0x40] sm:$0xff]
  %v353 = vld [vmem:[%s7 + $0x48] sm:$0xff]
  %v354 = vld [vmem:[%s7 + $0x50] sm:$0xff]
  %v355 = vld [vmem:[%s7 + $0x58] sm:$0xff]
  %v356 = vld [vmem:[%s7 + $0x60] sm:$0xff]
  %v357 = vld [vmem:[%s7 + $0x68] sm:$0xff]
  %v358 = vld [vmem:[%s7 + $0x70] sm:$0xff]
  %v359 = vld [vmem:[%s7 + $0x78] sm:$0xff]
  %360 = vmatprep.subr.mxu0 0.0
  %361 = vmatpush1.msra.mxu0 %v344
  %362 = vmatprep.subr.mxu0 0.0
  %363 = vmatpush1.msra.mxu0 %v345
  %364 = vmatprep.subr.mxu0 0.0
  %365 = vmatpush1.msra.mxu0 %v346
  %366 = vmatprep.subr.mxu0 0.0
  %367 = vmatpush1.msra.mxu0 %v347
  %368 = vmatprep.subr.mxu0 0.0
  %369 = vmatpush1.msra.mxu0 %v348
  %370 = vmatprep.subr.mxu0 0.0
  %371 = vmatpush1.msra.mxu0 %v349
  %372 = vmatprep.subr.mxu0 0.0
  %373 = vmatpush1.msra.mxu0 %v350
  %374 = vmatprep.subr.mxu0 0.0
  %375 = vmatpush1.msra.mxu0 %v351
  %376 = vmatprep.subr.mxu0 0.0
  %377 = vmatpush1.msra.mxu0 %v352
  %378 = vmatprep.subr.mxu0 0.0
  %379 = vmatpush1.msra.mxu0 %v353
  %380 = vmatprep.subr.mxu0 0.0
  %381 = vmatpush1.msra.mxu0 %v354
  %382 = vmatprep.subr.mxu0 0.0
  %383 = vmatpush1.msra.mxu0 %v355
  %384 = vmatprep.subr.mxu0 0.0
  %385 = vmatpush1.msra.mxu0 %v356
  %386 = vmatprep.subr.mxu0 0.0
  %387 = vmatpush1.msra.mxu0 %v357
  %388 = vmatprep.subr.mxu0 0.0
  %389 = vmatpush1.msra.mxu0 %v358
  %390 = vmatprep.subr.mxu0 0.0
  %391 = vmatpush1.msra.mxu0 %v359
  %392 = vmatprep.subr.mxu0 0.0
  %393 = vmatpush1.msra.mxu0 0.0
  %394 = vmatprep.subr.mxu0 0.0
  %395 = vmatpush1.msra.mxu0 0.0
  %396 = vmatprep.subr.mxu0 0.0
  %397 = vmatpush1.msra.mxu0 0.0
  %398 = vmatprep.subr.mxu0 0.0
  %399 = vmatpush1.msra.mxu0 0.0
  %400 = vmatprep.subr.mxu0 0.0
  %401 = vmatpush1.msra.mxu0 0.0
  %402 = vmatprep.subr.mxu0 0.0
  %403 = vmatpush1.msra.mxu0 0.0
  %404 = vmatprep.subr.mxu0 0.0
  %405 = vmatpush1.msra.mxu0 0.0
  %406 = vmatprep.subr.mxu0 0.0
  %407 = vmatpush1.msra.mxu0 0.0
  %408 = vmatprep.subr.mxu0 0.0
  %409 = vmatpush1.msra.mxu0 0.0
  %410 = vmatprep.subr.mxu0 0.0
  %411 = vmatpush1.msra.mxu0 0.0
  %412 = vmatprep.subr.mxu0 0.0
  %413 = vmatpush1.msra.mxu0 0.0
  %414 = vmatprep.subr.mxu0 0.0
  %415 = vmatpush1.msra.mxu0 0.0
  %416 = vmatprep.subr.mxu0 0.0
  %417 = vmatpush1.msra.mxu0 0.0
  %418 = vmatprep.subr.mxu0 0.0
  %419 = vmatpush1.msra.mxu0 0.0
  %420 = vmatprep.subr.mxu0 0.0
  %421 = vmatpush1.msra.mxu0 0.0
  %422 = vmatprep.subr.mxu0 0.0
  %423 = vmatpush1.msra.mxu0 0.0
  %424 = vmatprep.mubr.f32.mxu0 0.0
  %425 = vmatmul.mubr.f32.gmra.mrb[0].mxu0 %v336
  %v426 = vpop.f32.mrb[0].mxu0
  %v427 = vadd.f32 0.0, %v426
  %v428 = vpop.f32.mrb[0].mxu0
  %429 = vmatprep.mubr.f32.mxu0 0.0
  %430 = vmatmul.mubr.f32.gmra.mrb[0].mxu0 %v337
  %v431 = vpop.f32.mrb[0].mxu0
  %v432 = vadd.f32 0.0, %v431
  %v433 = vpop.f32.mrb[0].mxu0
  %434 = vmatprep.mubr.f32.mxu0 0.0
  %435 = vmatmul.mubr.f32.gmra.mrb[0].mxu0 %v338
  %v436 = vpop.f32.mrb[0].mxu0
  %v437 = vadd.f32 0.0, %v436
  %v438 = vpop.f32.mrb[0].mxu0
  %439 = vmatprep.mubr.f32.mxu0 0.0
  %440 = vmatmul.mubr.f32.gmra.mrb[0].mxu0 %v339
  %v441 = vpop.f32.mrb[0].mxu0
  %v442 = vadd.f32 0.0, %v441
  %v443 = vpop.f32.mrb[0].mxu0
  %444 = vmatprep.mubr.f32.mxu0 0.0
  %445 = vmatmul.mubr.f32.gmra.mrb[0].mxu0 %v340
  %v446 = vpop.f32.mrb[0].mxu0
  %v447 = vadd.f32 0.0, %v446
  %v448 = vpop.f32.mrb[0].mxu0
  %449 = vmatprep.mubr.f32.mxu0 0.0
  %450 = vmatmul.mubr.f32.gmra.mrb[0].mxu0 %v341
  %v451 = vpop.f32.mrb[0].mxu0
  %v452 = vadd.f32 0.0, %v451
  %v453 = vpop.f32.mrb[0].mxu0
  %454 = vmatprep.mubr.f32.mxu0 0.0
  %455 = vmatmul.mubr.f32.gmra.mrb[0].mxu0 %v342
  %v456 = vpop.f32.mrb[0].mxu0
  %v457 = vadd.f32 0.0, %v456
  %v458 = vpop.f32.mrb[0].mxu0
  %459 = vmatprep.mubr.f32.mxu0 0.0
  %460 = vmatmul.mubr.f32.gmra.mrb[0].mxu0 %v343
  %v461 = vpop.f32.mrb[0].mxu0
  %v462 = vadd.f32 0.0, %v461
  %v463 = vpop.f32.mrb[0].mxu0
  %464 = vdwg.mxu0
  %v465 = vpack.c.bf16 %v432, %v427
  %v466 = vpack.c.bf16 %v442, %v437
  %v467 = vpack.c.bf16 %v452, %v447
  %v468 = vpack.c.bf16 %v462, %v457
  %v469 = vld [vmem:[%s8] sm:$0x1]
  %v471 = vlaneseq
  %v472 = vshrl.u32 %v471, 7
  %v473 = vsub.s32 0, %v472
  %v474 = vrot.slane %v469, %v473
  %476 = vmatprep.subr.bf16.mxu0 0
  %477 = vmatpush1.bf16.msra.mxu0 %v465
  %478 = vmatprep.subr.bf16.mxu0 0
  %479 = vmatpush1.bf16.msra.mxu0 %v466
  %480 = vmatprep.subr.bf16.mxu0 0
  %481 = vmatpush1.bf16.msra.mxu0 %v467
  %482 = vmatprep.subr.bf16.mxu0 0
  %483 = vmatpush1.bf16.msra.mxu0 %v468
  %484 = vmatprep.subr.bf16.mxu0 0
  %485 = vmatpush1.bf16.msra.mxu0 0
  %486 = vmatprep.subr.bf16.mxu0 0
  %487 = vmatpush1.bf16.msra.mxu0 0
  %488 = vmatprep.subr.bf16.mxu0 0
  %489 = vmatpush1.bf16.msra.mxu0 0
  %490 = vmatprep.subr.bf16.mxu0 0
  %491 = vmatpush1.bf16.msra.mxu0 0
  %492 = vmatprep.subr.bf16.mxu0 0
  %493 = vmatpush1.bf16.msra.mxu0 0
  %494 = vmatprep.subr.bf16.mxu0 0
  %495 = vmatpush1.bf16.msra.mxu0 0
  %496 = vmatprep.subr.bf16.mxu0 0
  %497 = vmatpush1.bf16.msra.mxu0 0
  %498 = vmatprep.subr.bf16.mxu0 0
  %499 = vmatpush1.bf16.msra.mxu0 0
  %500 = vmatprep.subr.bf16.mxu0 0
  %501 = vmatpush1.bf16.msra.mxu0 0
  %502 = vmatprep.subr.bf16.mxu0 0
  %503 = vmatpush1.bf16.msra.mxu0 0
  %504 = vmatprep.subr.bf16.mxu0 0
  %505 = vmatpush1.bf16.msra.mxu0 0
  %506 = vmatprep.subr.bf16.mxu0 0
  %507 = vmatpush1.bf16.msra.mxu0 0
  %508 = vmatprep.mubr.bf16.mxu0 0
  %509 = vmatmul.mubr.bf16.gmra.mrb[0].mxu0 %v230
  %v510 = vpop.f32.mrb[0].mxu0
  %v511 = vadd.f32 %v474, %v510
  %v512 = vpop.f32.mrb[0].mxu0
  %v513 = vpop.f32.mrb[0].mxu0
  %v514 = vadd.f32 %v474, %v513
  %v515 = vpop.f32.mrb[0].mxu0
  %516 = vmatprep.mubr.bf16.mxu0 0
  %517 = vmatmul.mubr.bf16.gmra.mrb[0].mxu0 %v233
  %v518 = vpop.f32.mrb[0].mxu0
  %v519 = vadd.f32 %v474, %v518
  %v520 = vpop.f32.mrb[0].mxu0
  %v521 = vpop.f32.mrb[0].mxu0
  %v522 = vadd.f32 %v474, %v521
  %v523 = vpop.f32.mrb[0].mxu0
  %524 = vmatprep.mubr.bf16.mxu0 0
  %525 = vmatmul.mubr.bf16.gmra.mrb[0].mxu0 %v236
  %v526 = vpop.f32.mrb[0].mxu0
  %v527 = vadd.f32 %v474, %v526
  %v528 = vpop.f32.mrb[0].mxu0
  %v529 = vpop.f32.mrb[0].mxu0
  %v530 = vadd.f32 %v474, %v529
  %v531 = vpop.f32.mrb[0].mxu0
  %532 = vmatprep.mubr.bf16.mxu0 0
  %533 = vmatmul.mubr.bf16.gmra.mrb[0].mxu0 %v239
  %v534 = vpop.f32.mrb[0].mxu0
  %v535 = vadd.f32 %v474, %v534
  %v536 = vpop.f32.mrb[0].mxu0
  %v537 = vpop.f32.mrb[0].mxu0
  %v538 = vadd.f32 %v474, %v537
  %v539 = vpop.f32.mrb[0].mxu0
  %540 = vdwg.mxu0
  %v541 = vmax.f32 %v511, 0.0
  %v542 = vmax.f32 %v514, 0.0
  %v543 = vmax.f32 %v519, 0.0
  %v544 = vmax.f32 %v522, 0.0
  %v545 = vmax.f32 %v527, 0.0
  %v546 = vmax.f32 %v530, 0.0
  %v547 = vmax.f32 %v535, 0.0
  %v548 = vmax.f32 %v538, 0.0
  %v549 = vld [vmem:[%s9] sm:$0xff]
  %v550 = vld [vmem:[%s9 + $0x8] sm:$0xff]
  %v551 = vld [vmem:[%s9 + $0x10] sm:$0xff]
  %v552 = vld [vmem:[%s9 + $0x18] sm:$0xff]
  %v553 = vld [vmem:[%s9 + $0x20] sm:$0xff]
  %v554 = vld [vmem:[%s9 + $0x28] sm:$0xff]
  %v555 = vld [vmem:[%s9 + $0x30] sm:$0xff]
  %v556 = vld [vmem:[%s9 + $0x38] sm:$0xff]
  %v557 = vld [vmem:[%s9 + $0x40] sm:$0xff]
  %v558 = vld [vmem:[%s9 + $0x48] sm:$0xff]
  %v559 = vld [vmem:[%s9 + $0x50] sm:$0xff]
  %v560 = vld [vmem:[%s9 + $0x58] sm:$0xff]
  %v561 = vld [vmem:[%s9 + $0x60] sm:$0xff]
  %v562 = vld [vmem:[%s9 + $0x68] sm:$0xff]
  %v563 = vld [vmem:[%s9 + $0x70] sm:$0xff]
  %v564 = vld [vmem:[%s9 + $0x78] sm:$0xff]
  %v565 = vld [vmem:[%s10] sm:$0x1]
  %v567 = vlaneseq
  %v568 = vshrl.u32 %v567, 7
  %v569 = vsub.s32 0, %v568
  %v570 = vrot.slane %v565, %v569
  %572 = vmatprep.subr.mxu0 0.0
  %573 = vmatpush1.msra.mxu0 %v549
  %574 = vmatprep.subr.mxu0 0.0
  %575 = vmatpush1.msra.mxu0 %v550
  %576 = vmatprep.subr.mxu0 0.0
  %577 = vmatpush1.msra.mxu0 %v551
  %578 = vmatprep.subr.mxu0 0.0
  %579 = vmatpush1.msra.mxu0 %v552
  %580 = vmatprep.subr.mxu0 0.0
  %581 = vmatpush1.msra.mxu0 %v553
  %582 = vmatprep.subr.mxu0 0.0
  %583 = vmatpush1.msra.mxu0 %v554
  %584 = vmatprep.subr.mxu0 0.0
  %585 = vmatpush1.msra.mxu0 %v555
  %586 = vmatprep.subr.mxu0 0.0
  %587 = vmatpush1.msra.mxu0 %v556
  %588 = vmatprep.subr.mxu0 0.0
  %589 = vmatpush1.msra.mxu0 %v557
  %590 = vmatprep.subr.mxu0 0.0
  %591 = vmatpush1.msra.mxu0 %v558
  %592 = vmatprep.subr.mxu0 0.0
  %593 = vmatpush1.msra.mxu0 %v559
  %594 = vmatprep.subr.mxu0 0.0
  %595 = vmatpush1.msra.mxu0 %v560
  %596 = vmatprep.subr.mxu0 0.0
  %597 = vmatpush1.msra.mxu0 %v561
  %598 = vmatprep.subr.mxu0 0.0
  %599 = vmatpush1.msra.mxu0 %v562
  %600 = vmatprep.subr.mxu0 0.0
  %601 = vmatpush1.msra.mxu0 %v563
  %602 = vmatprep.subr.mxu0 0.0
  %603 = vmatpush1.msra.mxu0 %v564
  %604 = vmatprep.subr.mxu0 0.0
  %605 = vmatpush1.msra.mxu0 0.0
  %606 = vmatprep.subr.mxu0 0.0
  %607 = vmatpush1.msra.mxu0 0.0
  %608 = vmatprep.subr.mxu0 0.0
  %609 = vmatpush1.msra.mxu0 0.0
  %610 = vmatprep.subr.mxu0 0.0
  %611 = vmatpush1.msra.mxu0 0.0
  %612 = vmatprep.subr.mxu0 0.0
  %613 = vmatpush1.msra.mxu0 0.0
  %614 = vmatprep.subr.mxu0 0.0
  %615 = vmatpush1.msra.mxu0 0.0
  %616 = vmatprep.subr.mxu0 0.0
  %617 = vmatpush1.msra.mxu0 0.0
  %618 = vmatprep.subr.mxu0 0.0
  %619 = vmatpush1.msra.mxu0 0.0
  %620 = vmatprep.subr.mxu0 0.0
  %621 = vmatpush1.msra.mxu0 0.0
  %622 = vmatprep.subr.mxu0 0.0
  %623 = vmatpush1.msra.mxu0 0.0
  %624 = vmatprep.subr.mxu0 0.0
  %625 = vmatpush1.msra.mxu0 0.0
  %626 = vmatprep.subr.mxu0 0.0
  %627 = vmatpush1.msra.mxu0 0.0
  %628 = vmatprep.subr.mxu0 0.0
  %629 = vmatpush1.msra.mxu0 0.0
  %630 = vmatprep.subr.mxu0 0.0
  %631 = vmatpush1.msra.mxu0 0.0
  %632 = vmatprep.subr.mxu0 0.0
  %633 = vmatpush1.msra.mxu0 0.0
  %634 = vmatprep.subr.mxu0 0.0
  %635 = vmatpush1.msra.mxu0 0.0
  %636 = vmatprep.mubr.f32.mxu0 0.0
  %637 = vmatmul.mubr.f32.gmra.mrb[0].mxu0 %v541
  %v638 = vpop.f32.mrb[0].mxu0
  %v639 = vadd.f32 %v570, %v638
  %v640 = vpop.f32.mrb[0].mxu0
  %641 = vmatprep.mubr.f32.mxu0 0.0
  %642 = vmatmul.mubr.f32.gmra.mrb[0].mxu0 %v542
  %v643 = vpop.f32.mrb[0].mxu0
  %v644 = vadd.f32 %v570, %v643
  %v645 = vpop.f32.mrb[0].mxu0
  %646 = vmatprep.mubr.f32.mxu0 0.0
  %647 = vmatmul.mubr.f32.gmra.mrb[0].mxu0 %v543
  %v648 = vpop.f32.mrb[0].mxu0
  %v649 = vadd.f32 %v570, %v648
  %v650 = vpop.f32.mrb[0].mxu0
  %651 = vmatprep.mubr.f32.mxu0 0.0
  %652 = vmatmul.mubr.f32.gmra.mrb[0].mxu0 %v544
  %v653 = vpop.f32.mrb[0].mxu0
  %v654 = vadd.f32 %v570, %v653
  %v655 = vpop.f32.mrb[0].mxu0
  %656 = vmatprep.mubr.f32.mxu0 0.0
  %657 = vmatmul.mubr.f32.gmra.mrb[0].mxu0 %v545
  %v658 = vpop.f32.mrb[0].mxu0
  %v659 = vadd.f32 %v570, %v658
  %v660 = vpop.f32.mrb[0].mxu0
  %661 = vmatprep.mubr.f32.mxu0 0.0
  %662 = vmatmul.mubr.f32.gmra.mrb[0].mxu0 %v546
  %v663 = vpop.f32.mrb[0].mxu0
  %v664 = vadd.f32 %v570, %v663
  %v665 = vpop.f32.mrb[0].mxu0
  %666 = vmatprep.mubr.f32.mxu0 0.0
  %667 = vmatmul.mubr.f32.gmra.mrb[0].mxu0 %v547
  %v668 = vpop.f32.mrb[0].mxu0
  %v669 = vadd.f32 %v570, %v668
  %v670 = vpop.f32.mrb[0].mxu0
  %671 = vmatprep.mubr.f32.mxu0 0.0
  %672 = vmatmul.mubr.f32.gmra.mrb[0].mxu0 %v548
  %v673 = vpop.f32.mrb[0].mxu0
  %v674 = vadd.f32 %v570, %v673
  %v675 = vpop.f32.mrb[0].mxu0
  %676 = vdwg.mxu0
  %v677 = vmax.f32 %v639, 0.0
  %v678 = vmax.f32 %v644, 0.0
  %v679 = vmax.f32 %v649, 0.0
  %v680 = vmax.f32 %v654, 0.0
  %v681 = vmax.f32 %v659, 0.0
  %v682 = vmax.f32 %v664, 0.0
  %v683 = vmax.f32 %v669, 0.0
  %v684 = vmax.f32 %v674, 0.0
  %v685 = vld [vmem:[%s11] sm:$0xff]
  %v686 = vld [vmem:[%s11 + $0x8] sm:$0xff]
  %v687 = vld [vmem:[%s11 + $0x10] sm:$0xff]
  %v688 = vld [vmem:[%s11 + $0x18] sm:$0xff]
  %v689 = vld [vmem:[%s11 + $0x20] sm:$0xff]
  %v690 = vld [vmem:[%s11 + $0x28] sm:$0xff]
  %v691 = vld [vmem:[%s11 + $0x30] sm:$0xff]
  %v692 = vld [vmem:[%s11 + $0x38] sm:$0xff]
  %v693 = vld [vmem:[%s11 + $0x40] sm:$0xff]
  %v694 = vld [vmem:[%s11 + $0x48] sm:$0xff]
  %v695 = vld [vmem:[%s11 + $0x50] sm:$0xff]
  %v696 = vld [vmem:[%s11 + $0x58] sm:$0xff]
  %v697 = vld [vmem:[%s11 + $0x60] sm:$0xff]
  %v698 = vld [vmem:[%s11 + $0x68] sm:$0xff]
  %v699 = vld [vmem:[%s11 + $0x70] sm:$0xff]
  %v700 = vld [vmem:[%s11 + $0x78] sm:$0xff]
  %v701 = vld [vmem:[%s12] sm:$0x1]
  %v703 = vlaneseq
  %v704 = vshrl.u32 %v703, 7
  %v705 = vsub.s32 0, %v704
  %v706 = vrot.slane %v701, %v705
  %708 = vmatprep.subr.mxu0 0.0
  %709 = vmatpush1.msra.mxu0 %v685
  %710 = vmatprep.subr.mxu0 0.0
  %711 = vmatpush1.msra.mxu0 %v686
  %712 = vmatprep.subr.mxu0 0.0
  %713 = vmatpush1.msra.mxu0 %v687
  %714 = vmatprep.subr.mxu0 0.0
  %715 = vmatpush1.msra.mxu0 %v688
  %716 = vmatprep.subr.mxu0 0.0
  %717 = vmatpush1.msra.mxu0 %v689
  %718 = vmatprep.subr.mxu0 0.0
  %719 = vmatpush1.msra.mxu0 %v690
  %720 = vmatprep.subr.mxu0 0.0
  %721 = vmatpush1.msra.mxu0 %v691
  %722 = vmatprep.subr.mxu0 0.0
  %723 = vmatpush1.msra.mxu0 %v692
  %724 = vmatprep.subr.mxu0 0.0
  %725 = vmatpush1.msra.mxu0 %v693
  %726 = vmatprep.subr.mxu0 0.0
  %727 = vmatpush1.msra.mxu0 %v694
  %728 = vmatprep.subr.mxu0 0.0
  %729 = vmatpush1.msra.mxu0 %v695
  %730 = vmatprep.subr.mxu0 0.0
  %731 = vmatpush1.msra.mxu0 %v696
  %732 = vmatprep.subr.mxu0 0.0
  %733 = vmatpush1.msra.mxu0 %v697
  %734 = vmatprep.subr.mxu0 0.0
  %735 = vmatpush1.msra.mxu0 %v698
  %736 = vmatprep.subr.mxu0 0.0
  %737 = vmatpush1.msra.mxu0 %v699
  %738 = vmatprep.subr.mxu0 0.0
  %739 = vmatpush1.msra.mxu0 %v700
  %740 = vmatprep.subr.mxu0 0.0
  %741 = vmatpush1.msra.mxu0 0.0
  %742 = vmatprep.subr.mxu0 0.0
  %743 = vmatpush1.msra.mxu0 0.0
  %744 = vmatprep.subr.mxu0 0.0
  %745 = vmatpush1.msra.mxu0 0.0
  %746 = vmatprep.subr.mxu0 0.0
  %747 = vmatpush1.msra.mxu0 0.0
  %748 = vmatprep.subr.mxu0 0.0
  %749 = vmatpush1.msra.mxu0 0.0
  %750 = vmatprep.subr.mxu0 0.0
  %751 = vmatpush1.msra.mxu0 0.0
  %752 = vmatprep.subr.mxu0 0.0
  %753 = vmatpush1.msra.mxu0 0.0
  %754 = vmatprep.subr.mxu0 0.0
  %755 = vmatpush1.msra.mxu0 0.0
  %756 = vmatprep.subr.mxu0 0.0
  %757 = vmatpush1.msra.mxu0 0.0
  %758 = vmatprep.subr.mxu0 0.0
  %759 = vmatpush1.msra.mxu0 0.0
  %760 = vmatprep.subr.mxu0 0.0
  %761 = vmatpush1.msra.mxu0 0.0
  %762 = vmatprep.subr.mxu0 0.0
  %763 = vmatpush1.msra.mxu0 0.0
  %764 = vmatprep.subr.mxu0 0.0
  %765 = vmatpush1.msra.mxu0 0.0
  %766 = vmatprep.subr.mxu0 0.0
  %767 = vmatpush1.msra.mxu0 0.0
  %768 = vmatprep.subr.mxu0 0.0
  %769 = vmatpush1.msra.mxu0 0.0
  %770 = vmatprep.subr.mxu0 0.0
  %771 = vmatpush1.msra.mxu0 0.0
  %772 = vmatprep.mubr.f32.mxu0 0.0
  %773 = vmatmul.mubr.f32.gmra.mrb[0].mxu0 %v677
  %v774 = vpop.f32.mrb[0].mxu0
  %v775 = vadd.f32 %v706, %v774
  %v776 = vpop.f32.mrb[0].mxu0
  %777 = vmatprep.mubr.f32.mxu0 0.0
  %778 = vmatmul.mubr.f32.gmra.mrb[0].mxu0 %v678
  %v779 = vpop.f32.mrb[0].mxu0
  %v780 = vadd.f32 %v706, %v779
  %v781 = vpop.f32.mrb[0].mxu0
  %782 = vmatprep.mubr.f32.mxu0 0.0
  %783 = vmatmul.mubr.f32.gmra.mrb[0].mxu0 %v679
  %v784 = vpop.f32.mrb[0].mxu0
  %v785 = vadd.f32 %v706, %v784
  %v786 = vpop.f32.mrb[0].mxu0
  %787 = vmatprep.mubr.f32.mxu0 0.0
  %788 = vmatmul.mubr.f32.gmra.mrb[0].mxu0 %v680
  %v789 = vpop.f32.mrb[0].mxu0
  %v790 = vadd.f32 %v706, %v789
  %v791 = vpop.f32.mrb[0].mxu0
  %792 = vmatprep.mubr.f32.mxu0 0.0
  %793 = vmatmul.mubr.f32.gmra.mrb[0].mxu0 %v681
  %v794 = vpop.f32.mrb[0].mxu0
  %v795 = vadd.f32 %v706, %v794
  %v796 = vpop.f32.mrb[0].mxu0
  %797 = vmatprep.mubr.f32.mxu0 0.0
  %798 = vmatmul.mubr.f32.gmra.mrb[0].mxu0 %v682
  %v799 = vpop.f32.mrb[0].mxu0
  %v800 = vadd.f32 %v706, %v799
  %v801 = vpop.f32.mrb[0].mxu0
  %802 = vmatprep.mubr.f32.mxu0 0.0
  %803 = vmatmul.mubr.f32.gmra.mrb[0].mxu0 %v683
  %v804 = vpop.f32.mrb[0].mxu0
  %v805 = vadd.f32 %v706, %v804
  %v806 = vpop.f32.mrb[0].mxu0
  %807 = vmatprep.mubr.f32.mxu0 0.0
  %808 = vmatmul.mubr.f32.gmra.mrb[0].mxu0 %v684
  %v809 = vpop.f32.mrb[0].mxu0
  %v810 = vadd.f32 %v706, %v809
  %v811 = vpop.f32.mrb[0].mxu0
  %812 = vdwg.mxu0
  %813 = vst [vmem:[%s17] sm:$0xff] %v775
  %814 = vst [vmem:[%s17 + $0x8] sm:$0xff] %v780
  %815 = vst [vmem:[%s17 + $0x10] sm:$0xff] %v785
  %816 = vst [vmem:[%s17 + $0x18] sm:$0xff] %v790
  %817 = vst [vmem:[%s17 + $0x20] sm:$0xff] %v795
  %818 = vst [vmem:[%s17 + $0x28] sm:$0xff] %v800
  %819 = vst [vmem:[%s17 + $0x30] sm:$0xff] %v805
  %820 = vst [vmem:[%s17 + $0x38] sm:$0xff] %v810
  %v821 = vld [vmem:[%s2] sm:$0xff]
  %v823 = vsel %vm228, %v821, 0
  %825 = vmatprep.subr.mxu0 0.0
  %826 = vmatpush1.msra.mxu0 %v775
  %827 = vmatprep.subr.mxu0 0.0
  %828 = vmatpush1.msra.mxu0 %v780
  %829 = vmatprep.subr.mxu0 0.0
  %830 = vmatpush1.msra.mxu0 %v785
  %831 = vmatprep.subr.mxu0 0.0
  %832 = vmatpush1.msra.mxu0 %v790
  %833 = vmatprep.subr.mxu0 0.0
  %834 = vmatpush1.msra.mxu0 %v795
  %835 = vmatprep.subr.mxu0 0.0
  %836 = vmatpush1.msra.mxu0 %v800
  %837 = vmatprep.subr.mxu0 0.0
  %838 = vmatpush1.msra.mxu0 %v805
  %839 = vmatprep.subr.mxu0 0.0
  %840 = vmatpush1.msra.mxu0 %v810
  %841 = vmatprep.subr.mxu0 0.0
  %842 = vmatpush1.msra.mxu0 0.0
  %843 = vmatprep.subr.mxu0 0.0
  %844 = vmatpush1.msra.mxu0 0.0
  %845 = vmatprep.subr.mxu0 0.0
  %846 = vmatpush1.msra.mxu0 0.0
  %847 = vmatprep.subr.mxu0 0.0
  %848 = vmatpush1.msra.mxu0 0.0
  %849 = vmatprep.subr.mxu0 0.0
  %850 = vmatpush1.msra.mxu0 0.0
  %851 = vmatprep.subr.mxu0 0.0
  %852 = vmatpush1.msra.mxu0 0.0
  %853 = vmatprep.subr.mxu0 0.0
  %854 = vmatpush1.msra.mxu0 0.0
  %855 = vmatprep.subr.mxu0 0.0
  %856 = vmatpush1.msra.mxu0 0.0
  %857 = vmatprep.subr.mxu0 0.0
  %858 = vmatpush1.msra.mxu0 0.0
  %859 = vmatprep.subr.mxu0 0.0
  %860 = vmatpush1.msra.mxu0 0.0
  %861 = vmatprep.subr.mxu0 0.0
  %862 = vmatpush1.msra.mxu0 0.0
  %863 = vmatprep.subr.mxu0 0.0
  %864 = vmatpush1.msra.mxu0 0.0
  %865 = vmatprep.subr.mxu0 0.0
  %866 = vmatpush1.msra.mxu0 0.0
  %867 = vmatprep.subr.mxu0 0.0
  %868 = vmatpush1.msra.mxu0 0.0
  %869 = vmatprep.subr.mxu0 0.0
  %870 = vmatpush1.msra.mxu0 0.0
  %871 = vmatprep.subr.mxu0 0.0
  %872 = vmatpush1.msra.mxu0 0.0
  %873 = vmatprep.subr.mxu0 0.0
  %874 = vmatpush1.msra.mxu0 0.0
  %875 = vmatprep.subr.mxu0 0.0
  %876 = vmatpush1.msra.mxu0 0.0
  %877 = vmatprep.subr.mxu0 0.0
  %878 = vmatpush1.msra.mxu0 0.0
  %879 = vmatprep.subr.mxu0 0.0
  %880 = vmatpush1.msra.mxu0 0.0
  %881 = vmatprep.subr.mxu0 0.0
  %882 = vmatpush1.msra.mxu0 0.0
  %883 = vmatprep.subr.mxu0 0.0
  %884 = vmatpush1.msra.mxu0 0.0
  %885 = vmatprep.subr.mxu0 0.0
  %886 = vmatpush1.msra.mxu0 0.0
  %887 = vmatprep.subr.mxu0 0.0
  %888 = vmatpush1.msra.mxu0 0.0
  %889 = vmatprep.mubr.f32.mxu0 0.0
  %890 = vmatmul.mubr.f32.gmra.mrb[0].mxu0 %v823
  %v891 = vpop.f32.mrb[0].mxu0
  %v892 = vadd.f32 0.0, %v891
  %v893 = vpop.f32.mrb[0].mxu0
  %894 = vdwg.mxu0
  %895 = vst [vmem:[%s18] sm:$0xff] %v892
  %v896 = vld [vmem:[%s13] sm:$0xff]
  %v897 = vld [vmem:[%s13 + $0x8] sm:$0xff]
  %v898 = vld [vmem:[%s13 + $0x10] sm:$0xff]
  %v899 = vld [vmem:[%s13 + $0x18] sm:$0xff]
  %v900 = vld [vmem:[%s13 + $0x20] sm:$0xff]
  %v901 = vld [vmem:[%s13 + $0x28] sm:$0xff]
  %v902 = vld [vmem:[%s13 + $0x30] sm:$0xff]
  %v903 = vld [vmem:[%s13 + $0x38] sm:$0xff]
  %v904 = vld [vmem:[%s13 + $0x40] sm:$0xff]
  %v905 = vld [vmem:[%s13 + $0x48] sm:$0xff]
  %v906 = vld [vmem:[%s13 + $0x50] sm:$0xff]
  %v907 = vld [vmem:[%s13 + $0x58] sm:$0xff]
  %v908 = vld [vmem:[%s13 + $0x60] sm:$0xff]
  %v909 = vld [vmem:[%s13 + $0x68] sm:$0xff]
  %v910 = vld [vmem:[%s13 + $0x70] sm:$0xff]
  %v911 = vld [vmem:[%s13 + $0x78] sm:$0xff]
  %v912 = vld [vmem:[%s14] sm:$0x1]
  %v914 = vlaneseq
  %v915 = vshrl.u32 %v914, 7
  %v916 = vsub.s32 0, %v915
  %v917 = vrot.slane %v912, %v916
  %919 = vmatprep.subr.mxu0 0.0
  %920 = vmatpush1.msra.mxu0 %v896
  %921 = vmatprep.subr.mxu0 0.0
  %922 = vmatpush1.msra.mxu0 %v897
  %923 = vmatprep.subr.mxu0 0.0
  %924 = vmatpush1.msra.mxu0 %v898
  %925 = vmatprep.subr.mxu0 0.0
  %926 = vmatpush1.msra.mxu0 %v899
  %927 = vmatprep.subr.mxu0 0.0
  %928 = vmatpush1.msra.mxu0 %v900
  %929 = vmatprep.subr.mxu0 0.0
  %930 = vmatpush1.msra.mxu0 %v901
  %931 = vmatprep.subr.mxu0 0.0
  %932 = vmatpush1.msra.mxu0 %v902
  %933 = vmatprep.subr.mxu0 0.0
  %934 = vmatpush1.msra.mxu0 %v903
  %935 = vmatprep.subr.mxu0 0.0
  %936 = vmatpush1.msra.mxu0 %v904
  %937 = vmatprep.subr.mxu0 0.0
  %938 = vmatpush1.msra.mxu0 %v905
  %939 = vmatprep.subr.mxu0 0.0
  %940 = vmatpush1.msra.mxu0 %v906
  %941 = vmatprep.subr.mxu0 0.0
  %942 = vmatpush1.msra.mxu0 %v907
  %943 = vmatprep.subr.mxu0 0.0
  %944 = vmatpush1.msra.mxu0 %v908
  %945 = vmatprep.subr.mxu0 0.0
  %946 = vmatpush1.msra.mxu0 %v909
  %947 = vmatprep.subr.mxu0 0.0
  %948 = vmatpush1.msra.mxu0 %v910
  %949 = vmatprep.subr.mxu0 0.0
  %950 = vmatpush1.msra.mxu0 %v911
  %951 = vmatprep.subr.mxu0 0.0
  %952 = vmatpush1.msra.mxu0 0.0
  %953 = vmatprep.subr.mxu0 0.0
  %954 = vmatpush1.msra.mxu0 0.0
  %955 = vmatprep.subr.mxu0 0.0
  %956 = vmatpush1.msra.mxu0 0.0
  %957 = vmatprep.subr.mxu0 0.0
  %958 = vmatpush1.msra.mxu0 0.0
  %959 = vmatprep.subr.mxu0 0.0
  %960 = vmatpush1.msra.mxu0 0.0
  %961 = vmatprep.subr.mxu0 0.0
  %962 = vmatpush1.msra.mxu0 0.0
  %963 = vmatprep.subr.mxu0 0.0
  %964 = vmatpush1.msra.mxu0 0.0
  %965 = vmatprep.subr.mxu0 0.0
  %966 = vmatpush1.msra.mxu0 0.0
  %967 = vmatprep.subr.mxu0 0.0
  %968 = vmatpush1.msra.mxu0 0.0
  %969 = vmatprep.subr.mxu0 0.0
  %970 = vmatpush1.msra.mxu0 0.0
  %971 = vmatprep.subr.mxu0 0.0
  %972 = vmatpush1.msra.mxu0 0.0
  %973 = vmatprep.subr.mxu0 0.0
  %974 = vmatpush1.msra.mxu0 0.0
  %975 = vmatprep.subr.mxu0 0.0
  %976 = vmatpush1.msra.mxu0 0.0
  %977 = vmatprep.subr.mxu0 0.0
  %978 = vmatpush1.msra.mxu0 0.0
  %979 = vmatprep.subr.mxu0 0.0
  %980 = vmatpush1.msra.mxu0 0.0
  %981 = vmatprep.subr.mxu0 0.0
  %982 = vmatpush1.msra.mxu0 0.0
  %983 = vmatprep.mubr.f32.mxu0 0.0
  %984 = vmatmul.mubr.f32.gmra.mrb[0].mxu0 %v892
  %v985 = vpop.f32.mrb[0].mxu0
  %v986 = vadd.f32 %v917, %v985
  %v987 = vpop.f32.mrb[0].mxu0
  %988 = vdwg.mxu0
  %v989 = vmax.f32 %v986, 0.0
  %v990 = vld [vmem:[%s15] sm:$0xff]
  %v991 = vld [vmem:[%s15 + $0x8] sm:$0xff]
  %v992 = vld [vmem:[%s15 + $0x10] sm:$0xff]
  %v993 = vld [vmem:[%s15 + $0x18] sm:$0xff]
  %v994 = vld [vmem:[%s15 + $0x20] sm:$0xff]
  %v995 = vld [vmem:[%s15 + $0x28] sm:$0xff]
  %v996 = vld [vmem:[%s15 + $0x30] sm:$0xff]
  %v997 = vld [vmem:[%s15 + $0x38] sm:$0xff]
  %v998 = vld [vmem:[%s15 + $0x40] sm:$0xff]
  %v999 = vld [vmem:[%s15 + $0x48] sm:$0xff]
  %v1000 = vld [vmem:[%s15 + $0x50] sm:$0xff]
  %v1001 = vld [vmem:[%s15 + $0x58] sm:$0xff]
  %v1002 = vld [vmem:[%s15 + $0x60] sm:$0xff]
  %v1003 = vld [vmem:[%s15 + $0x68] sm:$0xff]
  %v1004 = vld [vmem:[%s15 + $0x70] sm:$0xff]
  %v1005 = vld [vmem:[%s15 + $0x78] sm:$0xff]
  %v1006 = vld [vmem:[%s16] sm:$0x1]
  %v1008 = vlaneseq
  %v1009 = vshrl.u32 %v1008, 7
  %v1010 = vsub.s32 0, %v1009
  %v1011 = vrot.slane %v1006, %v1010
  %1013 = vmatprep.subr.mxu0 0.0
  %1014 = vmatpush1.msra.mxu0 %v990
  %1015 = vmatprep.subr.mxu0 0.0
  %1016 = vmatpush1.msra.mxu0 %v991
  %1017 = vmatprep.subr.mxu0 0.0
  %1018 = vmatpush1.msra.mxu0 %v992
  %1019 = vmatprep.subr.mxu0 0.0
  %1020 = vmatpush1.msra.mxu0 %v993
  %1021 = vmatprep.subr.mxu0 0.0
  %1022 = vmatpush1.msra.mxu0 %v994
  %1023 = vmatprep.subr.mxu0 0.0
  %1024 = vmatpush1.msra.mxu0 %v995
  %1025 = vmatprep.subr.mxu0 0.0
  %1026 = vmatpush1.msra.mxu0 %v996
  %1027 = vmatprep.subr.mxu0 0.0
  %1028 = vmatpush1.msra.mxu0 %v997
  %1029 = vmatprep.subr.mxu0 0.0
  %1030 = vmatpush1.msra.mxu0 %v998
  %1031 = vmatprep.subr.mxu0 0.0
  %1032 = vmatpush1.msra.mxu0 %v999
  %1033 = vmatprep.subr.mxu0 0.0
  %1034 = vmatpush1.msra.mxu0 %v1000
  %1035 = vmatprep.subr.mxu0 0.0
  %1036 = vmatpush1.msra.mxu0 %v1001
  %1037 = vmatprep.subr.mxu0 0.0
  %1038 = vmatpush1.msra.mxu0 %v1002
  %1039 = vmatprep.subr.mxu0 0.0
  %1040 = vmatpush1.msra.mxu0 %v1003
  %1041 = vmatprep.subr.mxu0 0.0
  %1042 = vmatpush1.msra.mxu0 %v1004
  %1043 = vmatprep.subr.mxu0 0.0
  %1044 = vmatpush1.msra.mxu0 %v1005
  %1045 = vmatprep.subr.mxu0 0.0
  %1046 = vmatpush1.msra.mxu0 0.0
  %1047 = vmatprep.subr.mxu0 0.0
  %1048 = vmatpush1.msra.mxu0 0.0
  %1049 = vmatprep.subr.mxu0 0.0
  %1050 = vmatpush1.msra.mxu0 0.0
  %1051 = vmatprep.subr.mxu0 0.0
  %1052 = vmatpush1.msra.mxu0 0.0
  %1053 = vmatprep.subr.mxu0 0.0
  %1054 = vmatpush1.msra.mxu0 0.0
  %1055 = vmatprep.subr.mxu0 0.0
  %1056 = vmatpush1.msra.mxu0 0.0
  %1057 = vmatprep.subr.mxu0 0.0
  %1058 = vmatpush1.msra.mxu0 0.0
  %1059 = vmatprep.subr.mxu0 0.0
  %1060 = vmatpush1.msra.mxu0 0.0
  %1061 = vmatprep.subr.mxu0 0.0
  %1062 = vmatpush1.msra.mxu0 0.0
  %1063 = vmatprep.subr.mxu0 0.0
  %1064 = vmatpush1.msra.mxu0 0.0
  %1065 = vmatprep.subr.mxu0 0.0
  %1066 = vmatpush1.msra.mxu0 0.0
  %1067 = vmatprep.subr.mxu0 0.0
  %1068 = vmatpush1.msra.mxu0 0.0
  %1069 = vmatprep.subr.mxu0 0.0
  %1070 = vmatpush1.msra.mxu0 0.0
  %1071 = vmatprep.subr.mxu0 0.0
  %1072 = vmatpush1.msra.mxu0 0.0
  %1073 = vmatprep.subr.mxu0 0.0
  %1074 = vmatpush1.msra.mxu0 0.0
  %1075 = vmatprep.subr.mxu0 0.0
  %1076 = vmatpush1.msra.mxu0 0.0
  %1077 = vmatprep.mubr.f32.mxu0 0.0
  %1078 = vmatmul.mubr.f32.gmra.mrb[0].mxu0 %v989
  %v1079 = vpop.f32.mrb[0].mxu0
  %v1080 = vadd.f32 %v1011, %v1079
  %v1081 = vpop.f32.mrb[0].mxu0
  %1082 = vdwg.mxu0
  %1083 = vst [vmem:[%s19] sm:$0xff] %v1080
  // Predicated region
  $region70: #{i2bgnn_forward.1} parent=0 // pred_check
    _
  $region71: #{i2bgnn_forward.1} parent=0 // pred_check_branch
    %1085 = sbr.rel (0) target = $region73
  $region72: #{i2bgnn_forward.1} parent=0 // pred_region
    _
  $region73: #{i2bgnn_forward.1} parent=0 // pred_fallthru
    _
  // Predicated region
  $region74: #{i2bgnn_forward.1} parent=0 // pred_check
    _
  $region75: #{i2bgnn_forward.1} parent=0 // pred_check_branch
    %1087 = sbr.rel (0) target = $region77
  $region76: #{i2bgnn_forward.1} parent=0 // pred_region
    _
  $region77: #{i2bgnn_forward.1} parent=0 // pred_fallthru
    _
  // Predicated region
  $region78: #{i2bgnn_forward.1} parent=0 // pred_check
    _
  $region79: #{i2bgnn_forward.1} parent=0 // pred_check_branch
    %1089 = sbr.rel (0) target = $region81
  $region80: #{i2bgnn_forward.1} parent=0 // pred_region
    _
  $region81: #{i2bgnn_forward.1} parent=0 // pred_fallthru
    _
  // Predicated region
  $region82: #{i2bgnn_forward.1} parent=0 // pred_check
    _
  $region83: #{i2bgnn_forward.1} parent=0 // pred_check_branch
    %1091 = sbr.rel (0) target = $region85
  $region84: #{i2bgnn_forward.1} parent=0 // pred_region
    _
  $region85: #{i2bgnn_forward.1} parent=0 // pred_fallthru
    _
  // Predicated region
  $region86: #{i2bgnn_forward.1} parent=0 // pred_check
    _
  $region87: #{i2bgnn_forward.1} parent=0 // pred_check_branch
    %1093 = sbr.rel (0) target = $region89
  $region88: #{i2bgnn_forward.1} parent=0 // pred_region
    _
  $region89: #{i2bgnn_forward.1} parent=0 // pred_fallthru
    _
  // Predicated region
  $region90: #{i2bgnn_forward.1} parent=0 // pred_check
    _
  $region91: #{i2bgnn_forward.1} parent=0 // pred_check_branch
    %1095 = sbr.rel (0) target = $region93
  $region92: #{i2bgnn_forward.1} parent=0 // pred_region
    _
  $region93: #{i2bgnn_forward.1} parent=0 // pred_fallthru
    _

</llo_original>
